<compile_context>
chip_gen: v7x
topology: tpu7x:2x2x1
jax: 0.10.0
libtpu: 0.0.40
codegen_flags: <defaults>
</compile_context>

<pallas_src>
import functools

import jax
import jax.numpy as jnp
from jax.experimental import pallas as pl
from jax.experimental.pallas import tpu as pltpu


def _rmsnorm_kernel(x_ref, w_ref, o_ref, *, eps: float):
    # x_ref: (tile_rows, dim) block of the input (original dtype)
    # w_ref: (1, dim) weight, broadcast over rows
    # o_ref: (tile_rows, dim) output block (same dtype as input)
    #
    # NOTE: the last grid block may be ragged; rows past the true row count
    # contain undefined data and their stores are masked by Pallas. All math
    # here must therefore stay row-independent (it is: per-row lane reduction).
    x = x_ref[...].astype(jnp.float32)                 # x.float()
    ms = jnp.mean(x * x, axis=-1, keepdims=True)       # pow(2).mean(-1)  (XLU)
    inv = jax.lax.rsqrt(ms + eps)                      # rsqrt(... + eps) (EUP)
    w = w_ref[...].astype(jnp.float32)                 # weight.float()
    out = (x * inv) * (1.0 + w)                        # scale by (1 + w)
    o_ref[...] = out.astype(o_ref.dtype)               # type_as(x)


def _sublane_pack(itemsize: int) -> int:
    # Rows per fully-packed vreg sublane group: f32 -> 8, bf16 -> 16, int8/fp8 -> 32.
    return {4: 8, 2: 16, 1: 32}.get(itemsize, 8)


def _vmem_budgets():
    """(tile_budget_bytes, vmem_limit_bytes), generation-aware."""
    cap = 64 * 1024 * 1024  # conservative default == v7x per-TC VMEM
    try:
        info = pltpu.get_tpu_info()
        cap = int(getattr(info, "vmem_capacity_bytes", cap)) or cap
    except Exception:
        pass
    if cap >= 100 * 1024 * 1024:
        # v5e / v6e: 128 MiB VMEM — big tiles are free, fewer grid steps.
        return 56 * 1024 * 1024, 96 * 1024 * 1024
    # v7x: 64 MiB per TensorCore (both TCs hold their own double buffers
    # under dimension_semantics=("parallel",)) — stay well inside it.
    return 28 * 1024 * 1024, 48 * 1024 * 1024


def _pick_tile_rows(rows: int, dim: int, itemsize: int, budget: int) -> int:
    """Largest sublane-aligned row tile whose pipelined VMEM footprint fits `budget`.

    No artificial row cap: for narrow dims this keeps blocks multi-MiB so the
    fixed ~600-cycle per-grid-step overhead is amortized.
    """
    pack = _sublane_pack(itemsize)
    # Per-row VMEM per grid step:
    #   2 x itemsize (double-buffered input) + 2 x itemsize (double-buffered output)
    #   + ~12 B of f32 temporaries (x_f32, x*x / out) per element.
    bytes_per_row = dim * (2 * itemsize + 2 * itemsize + 12)
    tile = budget // max(1, bytes_per_row)
    tile = max(pack, (tile // pack) * pack)
    if tile >= rows:
        # Single block: block_shape == full array dims is always layout-legal.
        return rows
    return tile


def gemma3_rmsnorm(x: jax.Array, weight: jax.Array, eps: float = 1e-6,
                   *, tile_rows: int | None = None) -> jax.Array:
    """Pallas TPU implementation of Gemma3RMSNorm.forward.

    x: (..., dim), any float dtype. weight: (dim,). Returns same shape/dtype as x.
    `tile_rows` is an optional override (testing / tuning).
    """
    orig_shape = x.shape
    dim = orig_shape[-1]
    assert weight.shape == (dim,)

    rows = 1
    for s in orig_shape[:-1]:
        rows *= s

    x2d = x.reshape(rows, dim)
    w2d = weight.reshape(1, dim)

    itemsize = jnp.dtype(x.dtype).itemsize
    pack = _sublane_pack(itemsize)
    budget, vmem_limit = _vmem_budgets()

    if tile_rows is None:
        tile_rows = _pick_tile_rows(rows, dim, itemsize, budget)
    else:
        tile_rows = max(pack, (tile_rows // pack) * pack)
    if tile_rows >= rows:
        tile_rows = rows  # single full-extent block

    # Ragged last block is fine (masked stores); no padding, no even-rounding.
    num_tiles = pl.cdiv(rows, tile_rows)

    cost = pl.CostEstimate(
        flops=5 * rows * dim,                 # square, reduce, mul, add, mul (per elem)
        transcendentals=rows,                 # one rsqrt per row
        bytes_accessed=(2 * rows * dim * itemsize
                        + dim * jnp.dtype(weight.dtype).itemsize),
    )

    out2d = pl.pallas_call(
        functools.partial(_rmsnorm_kernel, eps=eps),
        out_shape=jax.ShapeDtypeStruct((rows, dim), x.dtype),
        grid_spec=pltpu.PrefetchScalarGridSpec(
            num_scalar_prefetch=0,
            grid=(num_tiles,),
            in_specs=[
                pl.BlockSpec((tile_rows, dim), lambda i: (i, 0)),
                pl.BlockSpec((1, dim), lambda i: (0, 0)),
            ],
            out_specs=pl.BlockSpec((tile_rows, dim), lambda i: (i, 0)),
        ),
        compiler_params=pltpu.CompilerParams(
            dimension_semantics=("parallel",),  # rows independent; megacore shards them
            vmem_limit_bytes=vmem_limit,
        ),
        cost_estimate=cost,
    )(x2d, w2d)

    return out2d.reshape(orig_shape)


def _reference(x, weight, eps=1e-6):
    xf = x.astype(jnp.float32)
    norm = xf * jax.lax.rsqrt(jnp.mean(xf * xf, axis=-1, keepdims=True) + eps)
    out = norm * (1.0 + weight.astype(jnp.float32))
    return out.astype(x.dtype)


if __name__ == "__main__":
    key = jax.random.PRNGKey(0)
    k1, k2, k3 = jax.random.split(key, 3)

    # Case 1: bf16, rows aligned to the sublane pack, zero-init weight (as in the module).
    batch, seq, hidden = 2, 8, 128
    x = jax.random.normal(k1, (batch, seq, hidden), dtype=jnp.float32).astype(jnp.bfloat16)
    weight = jnp.zeros((hidden,), dtype=jnp.float32)
    out = jax.block_until_ready(gemma3_rmsnorm(x, weight, eps=1e-6))
    ref = _reference(x, weight, eps=1e-6)
    assert out.shape == x.shape and out.dtype == x.dtype
    assert jnp.allclose(out.astype(jnp.float32), ref.astype(jnp.float32),
                        atol=1e-2, rtol=1e-2)

    # Case 2: f32, non-aligned row count (single full-extent block) + nonzero weight.
    x2 = jax.random.normal(k2, (3, 5, 256), dtype=jnp.float32)
    w2 = 0.1 * jax.random.normal(jax.random.PRNGKey(1), (256,), dtype=jnp.float32)
    out2 = jax.block_until_ready(gemma3_rmsnorm(x2, w2, eps=1e-6))
    ref2 = _reference(x2, w2, eps=1e-6)
    assert out2.shape == x2.shape and out2.dtype == x2.dtype
    assert jnp.allclose(out2, ref2, atol=1e-5, rtol=1e-5)

    # Case 3: forced small tile so the ragged-last-block (masked store) path is exercised:
    # rows = 21, tile_rows = 8 -> 3 grid steps, last block has 5 valid rows.
    x3 = jax.random.normal(k3, (3, 7, 128), dtype=jnp.float32)
    w3 = 0.05 * jax.random.normal(jax.random.PRNGKey(2), (128,), dtype=jnp.float32)
    out3 = jax.block_until_ready(gemma3_rmsnorm(x3, w3, eps=1e-6, tile_rows=8))
    ref3 = _reference(x3, w3, eps=1e-6)
    assert out3.shape == x3.shape and out3.dtype == x3.dtype
    assert jnp.allclose(out3, ref3, atol=1e-5, rtol=1e-5)

    print("KERNEL_OK")
</pallas_src>

<mosaic_0001>
module attributes {stable_mosaic.version = 11 : i64} {
  func.func @_rmsnorm_kernel(%arg0: i32, %arg1: memref<16x128xbf16, #tpu.memory_space<vmem>>, %arg2: memref<1x128xf32, #tpu.memory_space<vmem>>, %arg3: memref<16x128xbf16, #tpu.memory_space<vmem>>) attributes {dimension_semantics = [#tpu.dimension_semantics<parallel>], iteration_bounds = array<i64: 1>, scalar_prefetch = 0 : i64, scratch_operands = 0 : i64, tpu.core_type = #tpu.core_type<tc>, window_params = [{transform_indices = @transform_0, window_bounds = array<i64: 16, 128>}, {pipeline_mode = #tpu.pipeline_mode<synchronous>, transform_indices = @transform_1, window_bounds = array<i64: 1, 128>}, {transform_indices = @transform_2, window_bounds = array<i64: 16, 128>}]} {
    %c0 = arith.constant 0 : index
    %c0_0 = arith.constant 0 : index
    %0 = vector.load %arg1[%c0, %c0_0] : memref<16x128xbf16, #tpu.memory_space<vmem>>, vector<16x128xbf16>
    %1 = arith.extf %0 : vector<16x128xbf16> to vector<16x128xf32>
    %2 = arith.mulf %1, %1 : vector<16x128xf32>
    %cst = arith.constant dense<0.000000e+00> : vector<16xf32>
    %3 = vector.multi_reduction <add>, %2, %cst [1] : vector<16x128xf32> to vector<16xf32>
    %4 = vector.shape_cast %3 : vector<16xf32> to vector<16x1xf32>
    %cst_1 = arith.constant 1.280000e+02 : f32
    %5 = vector.broadcast %cst_1 : f32 to vector<16x1xf32>
    %6 = arith.divf %4, %5 : vector<16x1xf32>
    %cst_2 = arith.constant 9.99999997E-7 : f32
    %7 = vector.broadcast %cst_2 : f32 to vector<16x1xf32>
    %8 = arith.addf %6, %7 : vector<16x1xf32>
    %9 = math.rsqrt %8 : vector<16x1xf32>
    %c0_3 = arith.constant 0 : index
    %c0_4 = arith.constant 0 : index
    %10 = vector.load %arg2[%c0_3, %c0_4] : memref<1x128xf32, #tpu.memory_space<vmem>>, vector<1x128xf32>
    %11 = vector.broadcast %9 : vector<16x1xf32> to vector<16x128xf32>
    %12 = arith.mulf %1, %11 : vector<16x128xf32>
    %cst_5 = arith.constant 1.000000e+00 : f32
    %13 = vector.broadcast %cst_5 : f32 to vector<1x128xf32>
    %14 = arith.addf %13, %10 : vector<1x128xf32>
    %15 = vector.broadcast %14 : vector<1x128xf32> to vector<16x128xf32>
    %16 = arith.mulf %12, %15 : vector<16x128xf32>
    %17 = arith.truncf %16 : vector<16x128xf32> to vector<16x128xbf16>
    %c0_6 = arith.constant 0 : index
    %c0_7 = arith.constant 0 : index
    %18 = vector.load %arg3[%c0_6, %c0_7] : memref<16x128xbf16, #tpu.memory_space<vmem>>, vector<16x128xbf16>
    tpu.vector_store %arg3[%c0_6, %c0_7], %17 {strides = array<i32>} : memref<16x128xbf16, #tpu.memory_space<vmem>>, vector<16x128xbf16>,
    return
  }
  func.func @transform_0(%arg0: i32) -> (i32, i32) {
    %c0_i32 = arith.constant 0 : i32
    %c0_i32_0 = arith.constant 0 : i32
    return %arg0, %c0_i32 : i32, i32
  }
  func.func @transform_1(%arg0: i32) -> (i32, i32) {
    %c0_i32 = arith.constant 0 : i32
    %c0_i32_0 = arith.constant 0 : i32
    %c0_i32_1 = arith.constant 0 : i32
    return %c0_i32, %c0_i32_0 : i32, i32
  }
  func.func @transform_2(%arg0: i32) -> (i32, i32) {
    %c0_i32 = arith.constant 0 : i32
    %c0_i32_0 = arith.constant 0 : i32
    return %arg0, %c0_i32 : i32, i32
  }
}

</mosaic_0001>

<llo_original>
// kernel: tpu_custom_call.1
$region0: #{tpu_custom_call.1}
  #allocation0 [shape = 'u32[]', space=smem, size = 0x4, offset = 0x4, fixed_abs, tag = 'smem constant byte address 0x4 - core index']
  #allocation1 [shape = 'u32[144,128]{1,0:T(1,128)}', space=vmem, size = 0x12000, scoped, tag = 'internal scratch']
  %s0 = inlined_call_operand.hbm [shape: bf16[16,128], index: 0, kind: input, shape index: {}]
  %s1 = inlined_call_operand.vmem [shape: f32[1,128], index: 1, kind: input, shape index: {}]
  %s2 = inlined_call_operand.hbm [shape: bf16[16,128], index: 2, kind: output, shape index: {}]
  %s3 = sld [smem:[#allocation0]]
  $region22: #{tpu_custom_call.1} parent=0
    _
  %s5 = ssub.s32 1, %s3
  %s6 = scalar_select 0, %s5, %s3
  $region1: #{tpu_custom_call.1} parent=0
    #allocation2 [shape = 'u8[4096]{0}', space=vmem, size = 0x1000, scoped, tag = 'input window, operand 0, single buffered']
    #allocation3 [shape = 's32[1]{0}', space=sflag, size = 0x4, scoped, tag = 'scoped memory for tpu_custom_call.1']
    #allocation4 [shape = 's32[1]{0}', space=sflag, size = 0x4, scoped, tag = 'scoped memory for tpu_custom_call.1']
    #allocation5 [shape = 'u8[4096]{0}', space=vmem, size = 0x1000, scoped, tag = 'output window, operand 0, single buffered']
    %7 = vsyncpa [#allocation3], 0
    %8 = vsyncpa [#allocation4], 0
    // Predicated region
    $region2: #{tpu_custom_call.1} parent=1 // pred_check
      _
    $region3: #{tpu_custom_call.1} parent=1 // pred_check_branch
      %10 = sbr.rel (0) target = $region5
    $region4: #{tpu_custom_call.1} parent=1 // pred_region
      %s12 = ssub.s32 128, 128
      %13 = vsyncadd [#allocation3], %s12
      %s14 = sshll.u32 [#allocation2], 4
      %s15 = int_to_ptr.vmem [resolvable:$true] %s14
      %20 = dma.hbm_to_vmem [thread:$0]  %s0, 128, %s15, [#allocation3], 64, 64, 4
    $region5: #{tpu_custom_call.1} parent=1 // pred_fallthru
      _
    // Predicated region
    $region6: #{tpu_custom_call.1} parent=1 // pred_check
      _
    $region7: #{tpu_custom_call.1} parent=1 // pred_check_branch
      %22 = sbr.rel (0) target = $region9
    $region8: #{tpu_custom_call.1} parent=1 // pred_region
      _
    $region9: #{tpu_custom_call.1} parent=1 // pred_fallthru
      _
    // Predicated region
    $region10: #{tpu_custom_call.1} parent=1 // pred_check
      _
    $region11: #{tpu_custom_call.1} parent=1 // pred_check_branch
      %24 = sbr.rel (0) target = $region13
    $region12: #{tpu_custom_call.1} parent=1 // pred_region
      %25 = dma.done [#allocation3], 128
    $region13: #{tpu_custom_call.1} parent=1 // pred_fallthru
      _
    %v26 = vld [vmem:[#allocation2] sm:$0xf]
    %v27 = vld [vmem:[#allocation2 + $0x4] sm:$0xf]
    %v28 = vunpack.c.l.bf16 %v26
    %v29 = vunpack.c.l.bf16 %v27
    %v30 = vmul.f32 %v28, %v28
    %v31 = vmul.f32 %v29, %v29
    %32 = vadd.xlane.f32.xlu0 %v30
    %v33 = vpop.xlane.xlu0 %32
    %34 = vadd.xlane.f32.xlu0 %v31
    %v35 = vpop.xlane.xlu0 %34
    %v36 = vrcp.pop 128.0
    %v37 = vmul.f32 %v33, %v36
    %v38 = vmul.f32 %v35, %v36
    %v39 = vadd.f32 %v37, 1e-06
    %v40 = vadd.f32 %v38, 1e-06
    %v41 = vrsqrt.pop %v39
    %v42 = vrsqrt.pop %v40
    %v43 = vld [vmem:[%s1] sm:$0x1]
    %v44 = vmul.f32 %v28, %v41
    %v45 = vmul.f32 %v29, %v42
    %v46 = vadd.f32 %v43, 1.0
    %v48 = vlaneseq
    %v49 = vshrl.u32 %v48, 7
    %v50 = vsub.s32 0, %v49
    %v51 = vrot.slane %v46, %v50
    %v53 = vmul.f32 %v44, %v51
    %v54 = vmul.f32 %v45, %v51
    %v55 = vpack.c.bf16 %v54, %v53
    %v57 = vunpack.c.l.b16 %v55
    %v58 = vunpack.c.h.b16 %v55
    %v59 = vpack.c.b16 %v57, %v57
    %v60 = vpack.c.b16 %v58, %v58
    %63 = vst [vmem:[#allocation5] sm:$0xf] %v59
    %64 = vst [vmem:[#allocation5 + $0x4] sm:$0xf] %v60
    // Predicated region
    $region14: #{tpu_custom_call.1} parent=1 // pred_check
      _
    $region15: #{tpu_custom_call.1} parent=1 // pred_check_branch
      %66 = sbr.rel (0) target = $region17
    $region16: #{tpu_custom_call.1} parent=1 // pred_region
      %s68 = ssub.s32 128, 128
      %69 = vsyncadd [#allocation4], %s68
      %s70 = sshll.u32 [#allocation5], 4
      %s71 = int_to_ptr.vmem [resolvable:$true] %s70
      %76 = dma.vmem_to_hbm [thread:$0]  %s71, 128, %s2, [#allocation4], 64, 64, 4
    $region17: #{tpu_custom_call.1} parent=1 // pred_fallthru
      _
    // Predicated region
    $region18: #{tpu_custom_call.1} parent=1 // pred_check
      _
    $region19: #{tpu_custom_call.1} parent=1 // pred_check_branch
      %78 = sbr.rel (0) target = $region21
    $region20: #{tpu_custom_call.1} parent=1 // pred_region
      %79 = dma.done [#allocation4], 128
    $region21: #{tpu_custom_call.1} parent=1 // pred_fallthru
      _
    %80 = vsyncpa [#allocation3], 1
    %81 = vsyncpa [#allocation4], 1

</llo_original>
